<compile_context>
chip_gen: v6e
topology: v6e:2x2x1
jax: 0.10.0
libtpu: 0.0.40
codegen_flags: <defaults>
</compile_context>

<pallas_src>
import jax
import jax.numpy as jnp
from jax.experimental import pallas as pl
from jax.experimental.pallas import tpu as pltpu


# ------------------------- configuration (small, module-consistent) -------------------------
B = 2
IN_CHANS = 3
IMG_H = IMG_W = 64            # 64x64 image, 16x16 patches -> 4x4 token grid per image
KERNEL = (16, 16)
STRIDE = (16, 16)
PADDING = (0, 0)
EMBED_DIM = 256               # small but a multiple of 128 (lane-dense output)


def _round_up(a: int, b: int) -> int:
    return (a + b - 1) // b * b


def _pick_row_tile(M: int, cap: int = 512):
    """Largest multiple-of-16 divisor of M that is <= cap, preferring >= 2 grid steps
    (so v7x's two TensorCores both get work).  Returns None if no such divisor."""
    best = None
    for t in range(16, min(cap, M) + 1, 16):
        if M % t == 0 and (M // t >= 2 or M <= 16):
            best = t
    return best


# ------------------------- Pallas kernel: patches @ W^T + bias -------------------------
def _patch_embed_kernel(p_ref, w_ref, b_ref, o_ref):
    # p_ref: (tm, K) bf16 patch rows, w_ref: (K, N) bf16 flattened conv weight,
    # b_ref: (1, N) f32 bias, o_ref: (tm, N) f32 embeddings.
    o_ref[...] = (
        jnp.dot(p_ref[...], w_ref[...], preferred_element_type=jnp.float32)
        + b_ref[...]
    ).astype(o_ref.dtype)


def patch_embed_gemm(patches, w_t, bias):
    """patches: (M, K) bf16, w_t: (K, N) bf16, bias: (N,) f32 -> (M, N) f32."""
    M, K = patches.shape
    N = w_t.shape[1]

    tm = _pick_row_tile(M)
    Mp = M
    if tm is None:
        # Rare fallback for token counts with no multiple-of-16 divisor: pad rows.
        tm = min(512, _round_up(M, 16))
        Mp = _round_up(M, tm)
        patches = jnp.pad(patches, ((0, Mp - M), (0, 0)))

    cost = pl.CostEstimate(
        flops=2 * Mp * K * N,
        bytes_accessed=2 * (Mp * K + K * N) + 4 * (Mp * N + N),  # bf16 in, f32 out
        transcendentals=0,
    )

    out = pl.pallas_call(
        _patch_embed_kernel,
        out_shape=jax.ShapeDtypeStruct((Mp, N), jnp.float32),
        grid=(Mp // tm,),
        in_specs=[
            pl.BlockSpec((tm, K), lambda i: (i, 0)),   # patch rows: tiled over M
            pl.BlockSpec((K, N), lambda i: (0, 0)),    # weight: VMEM-resident across steps
            pl.BlockSpec((1, N), lambda i: (0, 0)),    # bias:   VMEM-resident across steps
        ],
        out_specs=pl.BlockSpec((tm, N), lambda i: (i, 0)),
        compiler_params=pltpu.CompilerParams(dimension_semantics=("parallel",)),
        cost_estimate=cost,
    )(patches, w_t, bias.reshape(1, N))
    return out[:M] if Mp != M else out


# ------------------------- once-per-model weight prep (hoisted) -------------------------
def prepare_patch_embed_params(w, b, *, compute_dtype=jnp.bfloat16):
    """Flatten the conv weight to (K, N) with K ordered (c, p, q) row-major (matching the
    patch flattening below) and cast to the MXU-native compute dtype.  Do this ONCE per
    model, not per forward call."""
    embed_dim, c, kh, kw = w.shape
    w_t = jnp.transpose(w.reshape(embed_dim, c * kh * kw)).astype(compute_dtype)  # (K, N)
    return w_t, b.astype(jnp.float32)


# ------------------------- wrapper: patchify (JAX glue) + Pallas GEMM -------------------------
def patch_embed_forward(x, w_t, bias, *, kernel_size=KERNEL, stride=STRIDE,
                        padding=PADDING, compute_dtype=jnp.bfloat16):
    """x: (B, C_in, H, W) NCHW; w_t: (C_in*kh*kw, embed_dim) from prepare_patch_embed_params;
    bias: (embed_dim,).  Returns (B, H', W', embed_dim), matching PatchEmbed.forward."""
    kh, kw = kernel_size
    sh, sw = stride
    ph, pw = padding
    # TODO(synk): overlapping conv (kernel_size != stride) has no patchify+GEMM form; SAM's
    # PatchEmbed always uses kernel_size == stride.
    assert (kh, kw) == (sh, sw), "only the non-overlapping (kernel == stride) path is implemented"
    # TODO(synk): fold the patchify reorder into the kernel's HBM->VMEM DMA (manual strided
    # make_async_copy from an x.reshape(B,C,Hp,kh,Wp,kw) HBM view) to remove the extra HBM
    # pass the XLA transpose costs at full SAM resolution; kept outside here because the
    # reorder is kept safely in XLA and done in bf16 (half the bytes).

    if ph or pw:
        x = jnp.pad(x, ((0, 0), (0, 0), (ph, ph), (pw, pw)))

    Bx, C, Hx, Wx = x.shape
    Hp, Wp = Hx // kh, Wx // kw
    # Conv's implicit floor on spatial dims; cast to bf16 BEFORE the reorder.
    x = x[:, :, : Hp * kh, : Wp * kw].astype(compute_dtype)

    # (B, C, Hp, kh, Wp, kw) -> (B, Hp, Wp, C, kh, kw) -> (B*Hp*Wp, C*kh*kw)
    patches = (
        x.reshape(Bx, C, Hp, kh, Wp, kw)
        .transpose(0, 2, 4, 1, 3, 5)
        .reshape(Bx * Hp * Wp, C * kh * kw)
    )
    embed_dim = w_t.shape[1]
    out2d = patch_embed_gemm(patches, w_t, bias)
    return out2d.reshape(Bx, Hp, Wp, embed_dim)


# ------------------------- pure-JAX reference (mirror of the PyTorch module) -------------------------
def ref_patch_embed(x, w, b, *, stride=STRIDE, padding=PADDING):
    y = jax.lax.conv_general_dilated(
        x, w,
        window_strides=stride,
        padding=[(padding[0], padding[0]), (padding[1], padding[1])],
        dimension_numbers=("NCHW", "OIHW", "NCHW"),
        precision=jax.lax.Precision.HIGHEST,
    )
    y = y + b[None, :, None, None]
    return jnp.transpose(y, (0, 2, 3, 1))            # NCHW -> BHWC (the .permute(0,2,3,1))


# ------------------------- main -------------------------
if __name__ == "__main__":
    key = jax.random.PRNGKey(0)
    kx, kw_, kb = jax.random.split(key, 3)

    x = jax.random.normal(kx, (B, IN_CHANS, IMG_H, IMG_W), dtype=jnp.float32)
    w = 0.04 * jax.random.normal(kw_, (EMBED_DIM, IN_CHANS, KERNEL[0], KERNEL[1]), dtype=jnp.float32)
    b = 0.02 * jax.random.normal(kb, (EMBED_DIM,), dtype=jnp.float32)

    # Once-per-model weight prep (hoisted out of the per-call path).
    w_t, b32 = prepare_patch_embed_params(w, b)

    fwd = jax.jit(patch_embed_forward)
    out = jax.block_until_ready(fwd(x, w_t, b32))

    Hp, Wp = IMG_H // KERNEL[0], IMG_W // KERNEL[1]
    assert out.shape == (B, Hp, Wp, EMBED_DIM), out.shape
    assert bool(jnp.all(jnp.isfinite(out)))

    # (1) Tight check: reference conv fed the same bf16-rounded inputs, f32 accumulation
    #     on both sides, so only accumulation order differs.
    x_q = x.astype(jnp.bfloat16).astype(jnp.float32)
    w_q = w.astype(jnp.bfloat16).astype(jnp.float32)
    ref_q = jax.block_until_ready(jax.jit(ref_patch_embed)(x_q, w_q, b))
    err_q = float(jnp.max(jnp.abs(out - ref_q)))
    assert err_q < 2e-3, f"mismatch vs bf16-input conv reference: {err_q}"

    # (2) Fidelity to the original f32 module (difference is bf16 input rounding only).
    ref = jax.block_until_ready(jax.jit(ref_patch_embed)(x, w, b))
    err = float(jnp.max(jnp.abs(out - ref)))
    assert err < 5e-2, f"mismatch vs f32 conv reference: {err}"

    print("KERNEL_OK")
</pallas_src>

<mosaic_0001>
module attributes {stable_mosaic.version = 11 : i64} {
  func.func @_patch_embed_kernel(%arg0: i32, %arg1: memref<16x768xbf16, #tpu.memory_space<vmem>>, %arg2: memref<768x256xbf16, #tpu.memory_space<vmem>>, %arg3: memref<1x256xf32, #tpu.memory_space<vmem>>, %arg4: memref<16x256xf32, #tpu.memory_space<vmem>>) attributes {dimension_semantics = [#tpu.dimension_semantics<parallel>], iteration_bounds = array<i64: 2>, scalar_prefetch = 0 : i64, scratch_operands = 0 : i64, tpu.core_type = #tpu.core_type<tc>, window_params = [{transform_indices = @transform_0, window_bounds = array<i64: 16, 768>}, {pipeline_mode = #tpu.pipeline_mode<synchronous>, transform_indices = @transform_1, window_bounds = array<i64: 768, 256>}, {pipeline_mode = #tpu.pipeline_mode<synchronous>, transform_indices = @transform_2, window_bounds = array<i64: 1, 256>}, {transform_indices = @transform_3, window_bounds = array<i64: 16, 256>}]} {
    %c0 = arith.constant 0 : index
    %c0_0 = arith.constant 0 : index
    %0 = vector.load %arg1[%c0, %c0_0] : memref<16x768xbf16, #tpu.memory_space<vmem>>, vector<16x768xbf16>
    %c0_1 = arith.constant 0 : index
    %c0_2 = arith.constant 0 : index
    %1 = vector.load %arg2[%c0_1, %c0_2] : memref<768x256xbf16, #tpu.memory_space<vmem>>, vector<768x256xbf16>
    %cst = arith.constant dense<0.000000e+00> : vector<16x256xf32>
    %2 = tpu.matmul %0, %1, %cst {dimension_numbers = #tpu.dot_dimension_numbers<[1], [0], [0], [1], [0, 0, 1, 1], [], []>} : vector<16x768xbf16>, vector<768x256xbf16>, vector<16x256xf32> -> vector<16x256xf32>
    %c0_3 = arith.constant 0 : index
    %c0_4 = arith.constant 0 : index
    %3 = vector.load %arg3[%c0_3, %c0_4] : memref<1x256xf32, #tpu.memory_space<vmem>>, vector<1x256xf32>
    %4 = vector.broadcast %3 : vector<1x256xf32> to vector<16x256xf32>
    %5 = arith.addf %2, %4 : vector<16x256xf32>
    %c0_5 = arith.constant 0 : index
    %c0_6 = arith.constant 0 : index
    %6 = vector.load %arg4[%c0_5, %c0_6] : memref<16x256xf32, #tpu.memory_space<vmem>>, vector<16x256xf32>
    tpu.vector_store %arg4[%c0_5, %c0_6], %5 {strides = array<i32>} : memref<16x256xf32, #tpu.memory_space<vmem>>, vector<16x256xf32>,
    return
  }
  func.func @transform_0(%arg0: i32) -> (i32, i32) {
    %c0_i32 = arith.constant 0 : i32
    %c0_i32_0 = arith.constant 0 : i32
    return %arg0, %c0_i32 : i32, i32
  }
  func.func @transform_1(%arg0: i32) -> (i32, i32) {
    %c0_i32 = arith.constant 0 : i32
    %c0_i32_0 = arith.constant 0 : i32
    %c0_i32_1 = arith.constant 0 : i32
    return %c0_i32, %c0_i32_0 : i32, i32
  }
  func.func @transform_2(%arg0: i32) -> (i32, i32) {
    %c0_i32 = arith.constant 0 : i32
    %c0_i32_0 = arith.constant 0 : i32
    %c0_i32_1 = arith.constant 0 : i32
    return %c0_i32, %c0_i32_0 : i32, i32
  }
  func.func @transform_3(%arg0: i32) -> (i32, i32) {
    %c0_i32 = arith.constant 0 : i32
    %c0_i32_0 = arith.constant 0 : i32
    return %arg0, %c0_i32 : i32, i32
  }
}

</mosaic_0001>

<llo_original>
// kernel: patch_embed_forward.1
$region0: #{patch_embed_forward.1}
  #allocation0 [shape = 'u32[]', space=smem, size = 0x4, offset = 0x4, fixed_abs, tag = 'smem constant byte address 0x4 - core index']
  #allocation1 [shape = 'u32[144,128]{1,0:T(1,128)}', space=vmem, size = 0x12000, scoped, tag = 'internal scratch']
  %s0 = inlined_call_operand.vmem [shape: bf16[32,768], index: 0, kind: input, shape index: {}]
  %s1 = inlined_call_operand.vmem [shape: bf16[768,256], index: 1, kind: input, shape index: {}]
  %s2 = inlined_call_operand.vmem [shape: f32[1,256], index: 2, kind: input, shape index: {}]
  %s3 = inlined_call_operand.vmem [shape: f32[32,256], index: 3, kind: output, shape index: {}]
  %s4 = sld [smem:[#allocation0]]
  $region45: #{patch_embed_forward.1} parent=0
    _
  %s6 = ssub.s32 1, %s4
  %s7 = scalar_select 0, %s6, %s4
  loop: start=0, step=1, limit=4
  $region2: #{patch_embed_forward.1} parent=0 // loop_pre_header
    _
  $region3: #{patch_embed_forward.1} parent=0 // loop_header
    %s9 = sphi 0, %s13
    %p10 = scmp.ge.s32.totalorder %s9, 4
    %s19 = sphi 0, %s21
    %s22 = sphi 0, %s19
    %s23 = sphi 0, %s22
    %s39 = sphi 0, %s23
    %s43 = sphi 0, %s43
    %s45 = sphi 0, %s43
    %s46 = sphi 0, %s45
    %s60 = sphi 0, %s46
    %s64 = sphi 0, %s64
    %s66 = sphi 0, %s64
    %s67 = sphi 0, %s66
    %s81 = sphi 0, %s67
    %s87 = sphi 0, %s89
    %s90 = sphi 0, %s87
    %s91 = sphi 0, %s90
    %s107 = sphi 0, %s91
  $region4: #{patch_embed_forward.1} parent=0 // loop_header_branch
    %12 = sbr.rel (%p10) target = $region8
  $region5: #{patch_embed_forward.1} parent=0 // loop_body
    %s14 = ssub.s32 %s9, 1
    %s15 = ssub.s32 %s9, 2
    %s16 = sadd.s32 %s9, 1
    %s17 = ssub.s32 %s9, %s16
    %p18 = scmp.eq.s32.totalorder %s17, 0
    %s20 = sadd.s32 %s19, 1
    %s21 = scalar_select %p18, %s19, %s20
    %p24 = pneg %p18
    %p25 = scmp.eq.s32.totalorder %s9, 1
    %p26 = por %p24, %p25
    %p27 = scmp.ne.s32.totalorder %s19, %s22
    %p28 = scmp.eq.s32.totalorder %s9, 0
    %p29 = por %p27, %p28
    %p30 = scmp.ne.s32.totalorder %s19, %s22
    %p31 = scmp.eq.s32.totalorder %s14, 1
    %p32 = por %p30, %p31
    %p33 = scmp.ne.s32.totalorder %s22, %s23
    %p34 = scmp.eq.s32.totalorder %s14, 0
    %p35 = por %p33, %p34
    %p36 = scmp.ne.s32.totalorder %s22, %s23
    %p37 = scmp.eq.s32.totalorder %s15, 1
    %p38 = por %p36, %p37
    %p40 = scmp.ne.s32.totalorder %s23, %s39
    %p41 = scmp.eq.s32.totalorder %s15, 0
    %p42 = por %p40, %p41
    %s44 = sadd.s32 %s43, 1
    %p47 = scmp.eq.s32.totalorder %s9, 1
    %p48 = scmp.ne.s32.totalorder %s43, %s45
    %p49 = scmp.eq.s32.totalorder %s9, 0
    %p50 = por %p48, %p49
    %p51 = scmp.ne.s32.totalorder %s43, %s45
    %p52 = scmp.eq.s32.totalorder %s14, 1
    %p53 = por %p51, %p52
    %p54 = scmp.ne.s32.totalorder %s45, %s46
    %p55 = scmp.eq.s32.totalorder %s14, 0
    %p56 = por %p54, %p55
    %p57 = scmp.ne.s32.totalorder %s45, %s46
    %p58 = scmp.eq.s32.totalorder %s15, 1
    %p59 = por %p57, %p58
    %p61 = scmp.ne.s32.totalorder %s46, %s60
    %p62 = scmp.eq.s32.totalorder %s15, 0
    %p63 = por %p61, %p62
    %s65 = sadd.s32 %s64, 1
    %p68 = scmp.eq.s32.totalorder %s9, 1
    %p69 = scmp.ne.s32.totalorder %s64, %s66
    %p70 = scmp.eq.s32.totalorder %s9, 0
    %p71 = por %p69, %p70
    %p72 = scmp.ne.s32.totalorder %s64, %s66
    %p73 = scmp.eq.s32.totalorder %s14, 1
    %p74 = por %p72, %p73
    %p75 = scmp.ne.s32.totalorder %s66, %s67
    %p76 = scmp.eq.s32.totalorder %s14, 0
    %p77 = por %p75, %p76
    %p78 = scmp.ne.s32.totalorder %s66, %s67
    %p79 = scmp.eq.s32.totalorder %s15, 1
    %p80 = por %p78, %p79
    %p82 = scmp.ne.s32.totalorder %s67, %s81
    %p83 = scmp.eq.s32.totalorder %s15, 0
    %p84 = por %p82, %p83
    %s85 = ssub.s32 %s9, %s16
    %p86 = scmp.eq.s32.totalorder %s85, 0
    %s88 = sadd.s32 %s87, 1
    %s89 = scalar_select %p86, %s87, %s88
    %p92 = pneg %p86
    %p93 = scmp.eq.s32.totalorder %s9, 1
    %p94 = por %p92, %p93
    %p95 = scmp.ne.s32.totalorder %s87, %s90
    %p96 = scmp.eq.s32.totalorder %s9, 0
    %p97 = por %p95, %p96
    %p98 = scmp.ne.s32.totalorder %s87, %s90
    %p99 = scmp.eq.s32.totalorder %s14, 1
    %p100 = por %p98, %p99
    %p101 = scmp.ne.s32.totalorder %s90, %s91
    %p102 = scmp.eq.s32.totalorder %s14, 0
    %p103 = por %p101, %p102
    %p104 = scmp.ne.s32.totalorder %s90, %s91
    %p105 = scmp.eq.s32.totalorder %s15, 1
    %p106 = por %p104, %p105
    %p108 = scmp.ne.s32.totalorder %s91, %s107
    %p109 = scmp.eq.s32.totalorder %s15, 0
    %p110 = por %p108, %p109
    %p111 = scmp.le.s32.totalorder 1, %s9
    %p112 = scmp.lt.s32.totalorder %s9, 3
    %p113 = pnand %p111, %p112
    %p114 = pneg %p113
    // Predicated region
    $region9: #{patch_embed_forward.1} parent=5 // pred_check
      _
    $region10: #{patch_embed_forward.1} parent=5 // pred_check_branch
      %116 = sbr.rel (%p113) target = $region12
    $region11: #{patch_embed_forward.1} parent=5 // pred_region
      %s117 = ssub.s32 %s9, 1
      // Predicated region
      $region13: #{patch_embed_forward.1} parent=11 // pred_check
        %p118 = pneg %p56
      $region14: #{patch_embed_forward.1} parent=11 // pred_check_branch
        %120 = sbr.rel (%p118) target = $region16
      $region15: #{patch_embed_forward.1} parent=11 // pred_region
        _
      $region16: #{patch_embed_forward.1} parent=11 // pred_fallthru
        _
      // Predicated region
      $region17: #{patch_embed_forward.1} parent=11 // pred_check
        %p121 = pneg %p77
      $region18: #{patch_embed_forward.1} parent=11 // pred_check_branch
        %123 = sbr.rel (%p121) target = $region20
      $region19: #{patch_embed_forward.1} parent=11 // pred_region
        _
      $region20: #{patch_embed_forward.1} parent=11 // pred_fallthru
        _
    $region12: #{patch_embed_forward.1} parent=5 // pred_fallthru
      _
    %p124 = scmp.lt.s32.totalorder %s9, 2
    // Predicated region
    $region21: #{patch_embed_forward.1} parent=5 // pred_check
      %p125 = pneg %p124
    $region22: #{patch_embed_forward.1} parent=5 // pred_check_branch
      %127 = sbr.rel (%p125) target = $region24
    $region23: #{patch_embed_forward.1} parent=5 // pred_region
      // Predicated region
      $region25: #{patch_embed_forward.1} parent=23 // pred_check
        %p128 = pneg %p29
      $region26: #{patch_embed_forward.1} parent=23 // pred_check_branch
        %130 = sbr.rel (%p128) target = $region28
      $region27: #{patch_embed_forward.1} parent=23 // pred_region
        %s131 = smul.u32 2, %s9
        %p132 = scmp.lt.s32.totalorder %s131, 3
        %s133 = scalar_select %p132, %s131, 3
        %s134 = smul.addr %s133, 6
        %s135 = smul.addr %s134, 4
        %s136 = scalar_lea.vmem %s0, %s135
        %s137 = smul.u32 2, %s9
      $region28: #{patch_embed_forward.1} parent=23 // pred_fallthru
        _
    $region24: #{patch_embed_forward.1} parent=5 // pred_fallthru
      _
    %p138 = scmp.le.s32.totalorder 1, %s9
    %p139 = scmp.lt.s32.totalorder %s9, 3
    %p140 = pnand %p138, %p139
    %p141 = pneg %p140
    // Predicated region
    $region29: #{patch_embed_forward.1} parent=5 // pred_check
      _
    $region30: #{patch_embed_forward.1} parent=5 // pred_check_branch
      %143 = sbr.rel (%p140) target = $region32
    $region31: #{patch_embed_forward.1} parent=5 // pred_region
      %s144 = ssub.s32 %s9, 1
      %s145 = smul.u32 2, %s14
      %p146 = scmp.lt.s32.totalorder %s145, 3
      %s147 = scalar_select %p146, %s145, 3
      %s148 = smul.addr %s147, 6
      %s149 = smul.addr %s148, 4
      %s150 = scalar_lea.vmem %s0, %s149
      %p151 = pneg %p35
      %p152 = pneg %p32
      %p153 = pneg %p56
      %p154 = pneg %p53
      %p155 = pneg %p77
      %p156 = pneg %p74
      %p157 = pneg %p103
      %p158 = pneg %p100
      %s159 = smul.u32 2, %s14
      %p160 = scmp.lt.s32.totalorder %s159, 3
      %s161 = scalar_select %p160, %s159, 3
      %s162 = smul.addr %s161, 2
      %s163 = smul.addr %s162, 8
      %s164 = scalar_lea.vmem %s3, %s163
      %s165 = smul.u32 2, %s14
      %p166 = scmp.lt.s32.totalorder %s165, 3
      %s167 = scalar_select %p166, %s165, 3
      %s168 = smul.addr %s167, 6
      %s169 = smul.addr %s168, 4
      %s170 = scalar_lea.vmem %s0, %s169
      %s171 = smul.u32 2, %s14
      %s172 = smul.u32 2, %s14
      %p173 = scmp.lt.s32.totalorder %s172, 3
      %s174 = scalar_select %p173, %s172, 3
      %s175 = smul.addr %s174, 2
      %s176 = smul.addr %s175, 8
      %s177 = scalar_lea.vmem %s3, %s176
      %s178 = smul.u32 2, %s14
      %v179 = vld [vmem:[%s170] sm:$0xff]
      %v180 = vld [vmem:[%s170 + $0x8] sm:$0xff]
      %v181 = vld [vmem:[%s170 + $0x10] sm:$0xff]
      %v182 = vld [vmem:[%s170 + $0x18] sm:$0xff]
      %v183 = vld [vmem:[%s170 + $0x20] sm:$0xff]
      %v184 = vld [vmem:[%s170 + $0x28] sm:$0xff]
      %v185 = vld [vmem:[%s1] sm:$0xff]
      %v186 = vld [vmem:[%s1 + $0x8] sm:$0xff]
      %v187 = vld [vmem:[%s1 + $0x10] sm:$0xff]
      %v188 = vld [vmem:[%s1 + $0x18] sm:$0xff]
      %v189 = vld [vmem:[%s1 + $0x20] sm:$0xff]
      %v190 = vld [vmem:[%s1 + $0x28] sm:$0xff]
      %v191 = vld [vmem:[%s1 + $0x30] sm:$0xff]
      %v192 = vld [vmem:[%s1 + $0x38] sm:$0xff]
      %v193 = vld [vmem:[%s1 + $0x40] sm:$0xff]
      %v194 = vld [vmem:[%s1 + $0x48] sm:$0xff]
      %v195 = vld [vmem:[%s1 + $0x50] sm:$0xff]
      %v196 = vld [vmem:[%s1 + $0x58] sm:$0xff]
      %v197 = vld [vmem:[%s1 + $0x60] sm:$0xff]
      %v198 = vld [vmem:[%s1 + $0x68] sm:$0xff]
      %v199 = vld [vmem:[%s1 + $0x70] sm:$0xff]
      %v200 = vld [vmem:[%s1 + $0x78] sm:$0xff]
      %v201 = vld [vmem:[%s1 + $0x80] sm:$0xff]
      %v202 = vld [vmem:[%s1 + $0x88] sm:$0xff]
      %v203 = vld [vmem:[%s1 + $0x90] sm:$0xff]
      %v204 = vld [vmem:[%s1 + $0x98] sm:$0xff]
      %v205 = vld [vmem:[%s1 + $0xa0] sm:$0xff]
      %v206 = vld [vmem:[%s1 + $0xa8] sm:$0xff]
      %v207 = vld [vmem:[%s1 + $0xb0] sm:$0xff]
      %v208 = vld [vmem:[%s1 + $0xb8] sm:$0xff]
      %v209 = vld [vmem:[%s1 + $0xc0] sm:$0xff]
      %v210 = vld [vmem:[%s1 + $0xc8] sm:$0xff]
      %v211 = vld [vmem:[%s1 + $0xd0] sm:$0xff]
      %v212 = vld [vmem:[%s1 + $0xd8] sm:$0xff]
      %v213 = vld [vmem:[%s1 + $0xe0] sm:$0xff]
      %v214 = vld [vmem:[%s1 + $0xe8] sm:$0xff]
      %v215 = vld [vmem:[%s1 + $0xf0] sm:$0xff]
      %v216 = vld [vmem:[%s1 + $0xf8] sm:$0xff]
      %v217 = vld [vmem:[%s1 + $0x100] sm:$0xff]
      %v218 = vld [vmem:[%s1 + $0x108] sm:$0xff]
      %v219 = vld [vmem:[%s1 + $0x110] sm:$0xff]
      %v220 = vld [vmem:[%s1 + $0x118] sm:$0xff]
      %v221 = vld [vmem:[%s1 + $0x120] sm:$0xff]
      %v222 = vld [vmem:[%s1 + $0x128] sm:$0xff]
      %v223 = vld [vmem:[%s1 + $0x130] sm:$0xff]
      %v224 = vld [vmem:[%s1 + $0x138] sm:$0xff]
      %v225 = vld [vmem:[%s1 + $0x140] sm:$0xff]
      %v226 = vld [vmem:[%s1 + $0x148] sm:$0xff]
      %v227 = vld [vmem:[%s1 + $0x150] sm:$0xff]
      %v228 = vld [vmem:[%s1 + $0x158] sm:$0xff]
      %v229 = vld [vmem:[%s1 + $0x160] sm:$0xff]
      %v230 = vld [vmem:[%s1 + $0x168] sm:$0xff]
      %v231 = vld [vmem:[%s1 + $0x170] sm:$0xff]
      %v232 = vld [vmem:[%s1 + $0x178] sm:$0xff]
      %v233 = vld [vmem:[%s1 + $0x180] sm:$0xff]
      %v234 = vld [vmem:[%s1 + $0x188] sm:$0xff]
      %v235 = vld [vmem:[%s1 + $0x190] sm:$0xff]
      %v236 = vld [vmem:[%s1 + $0x198] sm:$0xff]
      %v237 = vld [vmem:[%s1 + $0x1a0] sm:$0xff]
      %v238 = vld [vmem:[%s1 + $0x1a8] sm:$0xff]
      %v239 = vld [vmem:[%s1 + $0x1b0] sm:$0xff]
      %v240 = vld [vmem:[%s1 + $0x1b8] sm:$0xff]
      %v241 = vld [vmem:[%s1 + $0x1c0] sm:$0xff]
      %v242 = vld [vmem:[%s1 + $0x1c8] sm:$0xff]
      %v243 = vld [vmem:[%s1 + $0x1d0] sm:$0xff]
      %v244 = vld [vmem:[%s1 + $0x1d8] sm:$0xff]
      %v245 = vld [vmem:[%s1 + $0x1e0] sm:$0xff]
      %v246 = vld [vmem:[%s1 + $0x1e8] sm:$0xff]
      %v247 = vld [vmem:[%s1 + $0x1f0] sm:$0xff]
      %v248 = vld [vmem:[%s1 + $0x1f8] sm:$0xff]
      %v249 = vld [vmem:[%s1 + $0x200] sm:$0xff]
      %v250 = vld [vmem:[%s1 + $0x208] sm:$0xff]
      %v251 = vld [vmem:[%s1 + $0x210] sm:$0xff]
      %v252 = vld [vmem:[%s1 + $0x218] sm:$0xff]
      %v253 = vld [vmem:[%s1 + $0x220] sm:$0xff]
      %v254 = vld [vmem:[%s1 + $0x228] sm:$0xff]
      %v255 = vld [vmem:[%s1 + $0x230] sm:$0xff]
      %v256 = vld [vmem:[%s1 + $0x238] sm:$0xff]
      %v257 = vld [vmem:[%s1 + $0x240] sm:$0xff]
      %v258 = vld [vmem:[%s1 + $0x248] sm:$0xff]
      %v259 = vld [vmem:[%s1 + $0x250] sm:$0xff]
      %v260 = vld [vmem:[%s1 + $0x258] sm:$0xff]
      %v261 = vld [vmem:[%s1 + $0x260] sm:$0xff]
      %v262 = vld [vmem:[%s1 + $0x268] sm:$0xff]
      %v263 = vld [vmem:[%s1 + $0x270] sm:$0xff]
      %v264 = vld [vmem:[%s1 + $0x278] sm:$0xff]
      %v265 = vld [vmem:[%s1 + $0x280] sm:$0xff]
      %v266 = vld [vmem:[%s1 + $0x288] sm:$0xff]
      %v267 = vld [vmem:[%s1 + $0x290] sm:$0xff]
      %v268 = vld [vmem:[%s1 + $0x298] sm:$0xff]
      %v269 = vld [vmem:[%s1 + $0x2a0] sm:$0xff]
      %v270 = vld [vmem:[%s1 + $0x2a8] sm:$0xff]
      %v271 = vld [vmem:[%s1 + $0x2b0] sm:$0xff]
      %v272 = vld [vmem:[%s1 + $0x2b8] sm:$0xff]
      %v273 = vld [vmem:[%s1 + $0x2c0] sm:$0xff]
      %v274 = vld [vmem:[%s1 + $0x2c8] sm:$0xff]
      %v275 = vld [vmem:[%s1 + $0x2d0] sm:$0xff]
      %v276 = vld [vmem:[%s1 + $0x2d8] sm:$0xff]
      %v277 = vld [vmem:[%s1 + $0x2e0] sm:$0xff]
      %v278 = vld [vmem:[%s1 + $0x2e8] sm:$0xff]
      %v279 = vld [vmem:[%s1 + $0x2f0] sm:$0xff]
      %v280 = vld [vmem:[%s1 + $0x2f8] sm:$0xff]
      %v281 = vld [vmem:[%s2] sm:$0x3]
      %v283 = vlaneseq
      %v284 = vshrl.u32 %v283, 7
      %v285 = vsub.s32 0, %v284
      %v286 = vrot.slane %v281, %v285
      %v287 = vlaneseq
      %v288 = vshrl.u32 %v287, 7
      %v289 = vsub.s32 1, %v288
      %v290 = vrot.slane %v281, %v289
      %v299 = vunpack.c.l.b16 %v179
      %v300 = vunpack.c.h.b16 %v179
      %v301 = vunpack.c.l.b16 %v180
      %v302 = vunpack.c.h.b16 %v180
      %v303 = vunpack.c.l.b16 %v181
      %v304 = vunpack.c.h.b16 %v181
      %v305 = vunpack.c.l.b16 %v182
      %v306 = vunpack.c.h.b16 %v182
      %v307 = vunpack.c.l.b16 %v183
      %v308 = vunpack.c.h.b16 %v183
      %v309 = vunpack.c.l.b16 %v184
      %v310 = vunpack.c.h.b16 %v184
      %v311 = vpack.c.b16 %v305, %v299
      %v312 = vpack.c.b16 %v306, %v300
      %v313 = vpack.c.b16 %v307, %v301
      %v314 = vpack.c.b16 %v308, %v302
      %v315 = vpack.c.b16 %v309, %v303
      %v316 = vpack.c.b16 %v310, %v304
      %v419 = vunpack.c.l.b16 %v185
      %v420 = vunpack.c.h.b16 %v185
      %v421 = vunpack.c.l.b16 %v186
      %v422 = vunpack.c.h.b16 %v186
      %v423 = vunpack.c.l.b16 %v187
      %v424 = vunpack.c.h.b16 %v187
      %v425 = vunpack.c.l.b16 %v188
      %v426 = vunpack.c.h.b16 %v188
      %v427 = vunpack.c.l.b16 %v189
      %v428 = vunpack.c.h.b16 %v189
      %v429 = vunpack.c.l.b16 %v190
      %v430 = vunpack.c.h.b16 %v190
      %v431 = vunpack.c.l.b16 %v191
      %v432 = vunpack.c.h.b16 %v191
      %v433 = vunpack.c.l.b16 %v192
      %v434 = vunpack.c.h.b16 %v192
      %v435 = vunpack.c.l.b16 %v193
      %v436 = vunpack.c.h.b16 %v193
      %v437 = vunpack.c.l.b16 %v194
      %v438 = vunpack.c.h.b16 %v194
      %v439 = vunpack.c.l.b16 %v195
      %v440 = vunpack.c.h.b16 %v195
      %v441 = vunpack.c.l.b16 %v196
      %v442 = vunpack.c.h.b16 %v196
      %v443 = vunpack.c.l.b16 %v197
      %v444 = vunpack.c.h.b16 %v197
      %v445 = vunpack.c.l.b16 %v198
      %v446 = vunpack.c.h.b16 %v198
      %v447 = vunpack.c.l.b16 %v199
      %v448 = vunpack.c.h.b16 %v199
      %v449 = vunpack.c.l.b16 %v200
      %v450 = vunpack.c.h.b16 %v200
      %v451 = vunpack.c.l.b16 %v201
      %v452 = vunpack.c.h.b16 %v201
      %v453 = vunpack.c.l.b16 %v202
      %v454 = vunpack.c.h.b16 %v202
      %v455 = vunpack.c.l.b16 %v203
      %v456 = vunpack.c.h.b16 %v203
      %v457 = vunpack.c.l.b16 %v204
      %v458 = vunpack.c.h.b16 %v204
      %v459 = vunpack.c.l.b16 %v205
      %v460 = vunpack.c.h.b16 %v205
      %v461 = vunpack.c.l.b16 %v206
      %v462 = vunpack.c.h.b16 %v206
      %v463 = vunpack.c.l.b16 %v207
      %v464 = vunpack.c.h.b16 %v207
      %v465 = vunpack.c.l.b16 %v208
      %v466 = vunpack.c.h.b16 %v208
      %v467 = vunpack.c.l.b16 %v209
      %v468 = vunpack.c.h.b16 %v209
      %v469 = vunpack.c.l.b16 %v210
      %v470 = vunpack.c.h.b16 %v210
      %v471 = vunpack.c.l.b16 %v211
      %v472 = vunpack.c.h.b16 %v211
      %v473 = vunpack.c.l.b16 %v212
      %v474 = vunpack.c.h.b16 %v212
      %v475 = vunpack.c.l.b16 %v213
      %v476 = vunpack.c.h.b16 %v213
      %v477 = vunpack.c.l.b16 %v214
      %v478 = vunpack.c.h.b16 %v214
      %v479 = vunpack.c.l.b16 %v215
      %v480 = vunpack.c.h.b16 %v215
      %v481 = vunpack.c.l.b16 %v216
      %v482 = vunpack.c.h.b16 %v216
      %v483 = vunpack.c.l.b16 %v217
      %v484 = vunpack.c.h.b16 %v217
      %v485 = vunpack.c.l.b16 %v218
      %v486 = vunpack.c.h.b16 %v218
      %v487 = vunpack.c.l.b16 %v219
      %v488 = vunpack.c.h.b16 %v219
      %v489 = vunpack.c.l.b16 %v220
      %v490 = vunpack.c.h.b16 %v220
      %v491 = vunpack.c.l.b16 %v221
      %v492 = vunpack.c.h.b16 %v221
      %v493 = vunpack.c.l.b16 %v222
      %v494 = vunpack.c.h.b16 %v222
      %v495 = vunpack.c.l.b16 %v223
      %v496 = vunpack.c.h.b16 %v223
      %v497 = vunpack.c.l.b16 %v224
      %v498 = vunpack.c.h.b16 %v224
      %v499 = vunpack.c.l.b16 %v225
      %v500 = vunpack.c.h.b16 %v225
      %v501 = vunpack.c.l.b16 %v226
      %v502 = vunpack.c.h.b16 %v226
      %v503 = vunpack.c.l.b16 %v227
      %v504 = vunpack.c.h.b16 %v227
      %v505 = vunpack.c.l.b16 %v228
      %v506 = vunpack.c.h.b16 %v228
      %v507 = vunpack.c.l.b16 %v229
      %v508 = vunpack.c.h.b16 %v229
      %v509 = vunpack.c.l.b16 %v230
      %v510 = vunpack.c.h.b16 %v230
      %v511 = vunpack.c.l.b16 %v231
      %v512 = vunpack.c.h.b16 %v231
      %v513 = vunpack.c.l.b16 %v232
      %v514 = vunpack.c.h.b16 %v232
      %v515 = vunpack.c.l.b16 %v233
      %v516 = vunpack.c.h.b16 %v233
      %v517 = vunpack.c.l.b16 %v234
      %v518 = vunpack.c.h.b16 %v234
      %v519 = vunpack.c.l.b16 %v235
      %v520 = vunpack.c.h.b16 %v235
      %v521 = vunpack.c.l.b16 %v236
      %v522 = vunpack.c.h.b16 %v236
      %v523 = vunpack.c.l.b16 %v237
      %v524 = vunpack.c.h.b16 %v237
      %v525 = vunpack.c.l.b16 %v238
      %v526 = vunpack.c.h.b16 %v238
      %v527 = vunpack.c.l.b16 %v239
      %v528 = vunpack.c.h.b16 %v239
      %v529 = vunpack.c.l.b16 %v240
      %v530 = vunpack.c.h.b16 %v240
      %v531 = vunpack.c.l.b16 %v241
      %v532 = vunpack.c.h.b16 %v241
      %v533 = vunpack.c.l.b16 %v242
      %v534 = vunpack.c.h.b16 %v242
      %v535 = vunpack.c.l.b16 %v243
      %v536 = vunpack.c.h.b16 %v243
      %v537 = vunpack.c.l.b16 %v244
      %v538 = vunpack.c.h.b16 %v244
      %v539 = vunpack.c.l.b16 %v245
      %v540 = vunpack.c.h.b16 %v245
      %v541 = vunpack.c.l.b16 %v246
      %v542 = vunpack.c.h.b16 %v246
      %v543 = vunpack.c.l.b16 %v247
      %v544 = vunpack.c.h.b16 %v247
      %v545 = vunpack.c.l.b16 %v248
      %v546 = vunpack.c.h.b16 %v248
      %v547 = vunpack.c.l.b16 %v249
      %v548 = vunpack.c.h.b16 %v249
      %v549 = vunpack.c.l.b16 %v250
      %v550 = vunpack.c.h.b16 %v250
      %v551 = vunpack.c.l.b16 %v251
      %v552 = vunpack.c.h.b16 %v251
      %v553 = vunpack.c.l.b16 %v252
      %v554 = vunpack.c.h.b16 %v252
      %v555 = vunpack.c.l.b16 %v253
      %v556 = vunpack.c.h.b16 %v253
      %v557 = vunpack.c.l.b16 %v254
      %v558 = vunpack.c.h.b16 %v254
      %v559 = vunpack.c.l.b16 %v255
      %v560 = vunpack.c.h.b16 %v255
      %v561 = vunpack.c.l.b16 %v256
      %v562 = vunpack.c.h.b16 %v256
      %v563 = vunpack.c.l.b16 %v257
      %v564 = vunpack.c.h.b16 %v257
      %v565 = vunpack.c.l.b16 %v258
      %v566 = vunpack.c.h.b16 %v258
      %v567 = vunpack.c.l.b16 %v259
      %v568 = vunpack.c.h.b16 %v259
      %v569 = vunpack.c.l.b16 %v260
      %v570 = vunpack.c.h.b16 %v260
      %v571 = vunpack.c.l.b16 %v261
      %v572 = vunpack.c.h.b16 %v261
      %v573 = vunpack.c.l.b16 %v262
      %v574 = vunpack.c.h.b16 %v262
      %v575 = vunpack.c.l.b16 %v263
      %v576 = vunpack.c.h.b16 %v263
      %v577 = vunpack.c.l.b16 %v264
      %v578 = vunpack.c.h.b16 %v264
      %v579 = vunpack.c.l.b16 %v265
      %v580 = vunpack.c.h.b16 %v265
      %v581 = vunpack.c.l.b16 %v266
      %v582 = vunpack.c.h.b16 %v266
      %v583 = vunpack.c.l.b16 %v267
      %v584 = vunpack.c.h.b16 %v267
      %v585 = vunpack.c.l.b16 %v268
      %v586 = vunpack.c.h.b16 %v268
      %v587 = vunpack.c.l.b16 %v269
      %v588 = vunpack.c.h.b16 %v269
      %v589 = vunpack.c.l.b16 %v270
      %v590 = vunpack.c.h.b16 %v270
      %v591 = vunpack.c.l.b16 %v271
      %v592 = vunpack.c.h.b16 %v271
      %v593 = vunpack.c.l.b16 %v272
      %v594 = vunpack.c.h.b16 %v272
      %v595 = vunpack.c.l.b16 %v273
      %v596 = vunpack.c.h.b16 %v273
      %v597 = vunpack.c.l.b16 %v274
      %v598 = vunpack.c.h.b16 %v274
      %v599 = vunpack.c.l.b16 %v275
      %v600 = vunpack.c.h.b16 %v275
      %v601 = vunpack.c.l.b16 %v276
      %v602 = vunpack.c.h.b16 %v276
      %v603 = vunpack.c.l.b16 %v277
      %v604 = vunpack.c.h.b16 %v277
      %v605 = vunpack.c.l.b16 %v278
      %v606 = vunpack.c.h.b16 %v278
      %v607 = vunpack.c.l.b16 %v279
      %v608 = vunpack.c.h.b16 %v279
      %v609 = vunpack.c.l.b16 %v280
      %v610 = vunpack.c.h.b16 %v280
      %v611 = vpack.c.b16 %v421, %v419
      %v612 = vpack.c.b16 %v422, %v420
      %v613 = vpack.c.b16 %v425, %v423
      %v614 = vpack.c.b16 %v426, %v424
      %v615 = vpack.c.b16 %v429, %v427
      %v616 = vpack.c.b16 %v430, %v428
      %v617 = vpack.c.b16 %v433, %v431
      %v618 = vpack.c.b16 %v434, %v432
      %v619 = vpack.c.b16 %v437, %v435
      %v620 = vpack.c.b16 %v438, %v436
      %v621 = vpack.c.b16 %v441, %v439
      %v622 = vpack.c.b16 %v442, %v440
      %v623 = vpack.c.b16 %v445, %v443
      %v624 = vpack.c.b16 %v446, %v444
      %v625 = vpack.c.b16 %v449, %v447
      %v626 = vpack.c.b16 %v450, %v448
      %v627 = vpack.c.b16 %v453, %v451
      %v628 = vpack.c.b16 %v454, %v452
      %v629 = vpack.c.b16 %v457, %v455
      %v630 = vpack.c.b16 %v458, %v456
      %v631 = vpack.c.b16 %v461, %v459
      %v632 = vpack.c.b16 %v462, %v460
      %v633 = vpack.c.b16 %v465, %v463
      %v634 = vpack.c.b16 %v466, %v464
      %v635 = vpack.c.b16 %v469, %v467
      %v636 = vpack.c.b16 %v470, %v468
      %v637 = vpack.c.b16 %v473, %v471
      %v638 = vpack.c.b16 %v474, %v472
      %v639 = vpack.c.b16 %v477, %v475
      %v640 = vpack.c.b16 %v478, %v476
      %v641 = vpack.c.b16 %v481, %v479
      %v642 = vpack.c.b16 %v482, %v480
      %v643 = vpack.c.b16 %v485, %v483
      %v644 = vpack.c.b16 %v486, %v484
      %v645 = vpack.c.b16 %v489, %v487
      %v646 = vpack.c.b16 %v490, %v488
      %v647 = vpack.c.b16 %v493, %v491
      %v648 = vpack.c.b16 %v494, %v492
      %v649 = vpack.c.b16 %v497, %v495
      %v650 = vpack.c.b16 %v498, %v496
      %v651 = vpack.c.b16 %v501, %v499
      %v652 = vpack.c.b16 %v502, %v500
      %v653 = vpack.c.b16 %v505, %v503
      %v654 = vpack.c.b16 %v506, %v504
      %v655 = vpack.c.b16 %v509, %v507
      %v656 = vpack.c.b16 %v510, %v508
      %v657 = vpack.c.b16 %v513, %v511
      %v658 = vpack.c.b16 %v514, %v512
      %v659 = vpack.c.b16 %v517, %v515
      %v660 = vpack.c.b16 %v518, %v516
      %v661 = vpack.c.b16 %v521, %v519
      %v662 = vpack.c.b16 %v522, %v520
      %v663 = vpack.c.b16 %v525, %v523
      %v664 = vpack.c.b16 %v526, %v524
      %v665 = vpack.c.b16 %v529, %v527
      %v666 = vpack.c.b16 %v530, %v528
      %v667 = vpack.c.b16 %v533, %v531
      %v668 = vpack.c.b16 %v534, %v532
      %v669 = vpack.c.b16 %v537, %v535
      %v670 = vpack.c.b16 %v538, %v536
      %v671 = vpack.c.b16 %v541, %v539
      %v672 = vpack.c.b16 %v542, %v540
      %v673 = vpack.c.b16 %v545, %v543
      %v674 = vpack.c.b16 %v546, %v544
      %v675 = vpack.c.b16 %v549, %v547
      %v676 = vpack.c.b16 %v550, %v548
      %v677 = vpack.c.b16 %v553, %v551
      %v678 = vpack.c.b16 %v554, %v552
      %v679 = vpack.c.b16 %v557, %v555
      %v680 = vpack.c.b16 %v558, %v556
      %v681 = vpack.c.b16 %v561, %v559
      %v682 = vpack.c.b16 %v562, %v560
      %v683 = vpack.c.b16 %v565, %v563
      %v684 = vpack.c.b16 %v566, %v564
      %v685 = vpack.c.b16 %v569, %v567
      %v686 = vpack.c.b16 %v570, %v568
      %v687 = vpack.c.b16 %v573, %v571
      %v688 = vpack.c.b16 %v574, %v572
      %v689 = vpack.c.b16 %v577, %v575
      %v690 = vpack.c.b16 %v578, %v576
      %v691 = vpack.c.b16 %v581, %v579
      %v692 = vpack.c.b16 %v582, %v580
      %v693 = vpack.c.b16 %v585, %v583
      %v694 = vpack.c.b16 %v586, %v584
      %v695 = vpack.c.b16 %v589, %v587
      %v696 = vpack.c.b16 %v590, %v588
      %v697 = vpack.c.b16 %v593, %v591
      %v698 = vpack.c.b16 %v594, %v592
      %v699 = vpack.c.b16 %v597, %v595
      %v700 = vpack.c.b16 %v598, %v596
      %v701 = vpack.c.b16 %v601, %v599
      %v702 = vpack.c.b16 %v602, %v600
      %v703 = vpack.c.b16 %v605, %v603
      %v704 = vpack.c.b16 %v606, %v604
      %v705 = vpack.c.b16 %v609, %v607
      %v706 = vpack.c.b16 %v610, %v608
      %803 = vmatprep.subr.bf16.mxu0 %v626
      %804 = vmatpush1.bf16.msra.mxu0 %v625
      %805 = vmatprep.subr.bf16.mxu0 %v624
      %806 = vmatpush1.bf16.msra.mxu0 %v623
      %807 = vmatprep.subr.bf16.mxu0 %v622
      %808 = vmatpush1.bf16.msra.mxu0 %v621
      %809 = vmatprep.subr.bf16.mxu0 %v620
      %810 = vmatpush1.bf16.msra.mxu0 %v619
      %811 = vmatprep.subr.bf16.mxu0 %v618
      %812 = vmatpush1.bf16.msra.mxu0 %v617
      %813 = vmatprep.subr.bf16.mxu0 %v616
      %814 = vmatpush1.bf16.msra.mxu0 %v615
      %815 = vmatprep.subr.bf16.mxu0 %v614
      %816 = vmatpush1.bf16.msra.mxu0 %v613
      %817 = vmatprep.subr.bf16.mxu0 %v612
      %818 = vmatpush1.bf16.msra.mxu0 %v611
      %819 = vmatprep.subr.bf16.mxu0 %v642
      %820 = vmatpush2.bf16.msra.mxu0 %v641
      %821 = vmatprep.subr.bf16.mxu0 %v640
      %822 = vmatpush2.bf16.msra.mxu0 %v639
      %823 = vmatprep.subr.bf16.mxu0 %v638
      %824 = vmatpush2.bf16.msra.mxu0 %v637
      %825 = vmatprep.subr.bf16.mxu0 %v636
      %826 = vmatpush2.bf16.msra.mxu0 %v635
      %827 = vmatprep.subr.bf16.mxu0 %v634
      %828 = vmatpush2.bf16.msra.mxu0 %v633
      %829 = vmatprep.subr.bf16.mxu0 %v632
      %830 = vmatpush2.bf16.msra.mxu0 %v631
      %831 = vmatprep.subr.bf16.mxu0 %v630
      %832 = vmatpush2.bf16.msra.mxu0 %v629
      %833 = vmatprep.subr.bf16.mxu0 %v628
      %834 = vmatpush2.bf16.msra.mxu0 %v627
      %835 = vmatprep.mubr.bf16.mxu0 %v312
      %836 = vmatmul.mubr.bf16.gmra.mxu0 %v311
      %v837 = vpop.f32.mrf.mxu0
      %v838 = vadd.f32 %v286, %v837
      %v839 = vpop.f32.mrf.mxu0
      %v840 = vadd.f32 %v290, %v839
      %v841 = vpop.f32.mrf.mxu0
      %v842 = vadd.f32 %v286, %v841
      %v843 = vpop.f32.mrf.mxu0
      %v844 = vadd.f32 %v290, %v843
      %845 = vdwg.mxu0
      %846 = vmatprep.subr.bf16.mxu0 %v658
      %847 = vmatpush1.bf16.msra.mxu0 %v657
      %848 = vmatprep.subr.bf16.mxu0 %v656
      %849 = vmatpush1.bf16.msra.mxu0 %v655
      %850 = vmatprep.subr.bf16.mxu0 %v654
      %851 = vmatpush1.bf16.msra.mxu0 %v653
      %852 = vmatprep.subr.bf16.mxu0 %v652
      %853 = vmatpush1.bf16.msra.mxu0 %v651
      %854 = vmatprep.subr.bf16.mxu0 %v650
      %855 = vmatpush1.bf16.msra.mxu0 %v649
      %856 = vmatprep.subr.bf16.mxu0 %v648
      %857 = vmatpush1.bf16.msra.mxu0 %v647
      %858 = vmatprep.subr.bf16.mxu0 %v646
      %859 = vmatpush1.bf16.msra.mxu0 %v645
      %860 = vmatprep.subr.bf16.mxu0 %v644
      %861 = vmatpush1.bf16.msra.mxu0 %v643
      %862 = vmatprep.subr.bf16.mxu0 %v674
      %863 = vmatpush2.bf16.msra.mxu0 %v673
      %864 = vmatprep.subr.bf16.mxu0 %v672
      %865 = vmatpush2.bf16.msra.mxu0 %v671
      %866 = vmatprep.subr.bf16.mxu0 %v670
      %867 = vmatpush2.bf16.msra.mxu0 %v669
      %868 = vmatprep.subr.bf16.mxu0 %v668
      %869 = vmatpush2.bf16.msra.mxu0 %v667
      %870 = vmatprep.subr.bf16.mxu0 %v666
      %871 = vmatpush2.bf16.msra.mxu0 %v665
      %872 = vmatprep.subr.bf16.mxu0 %v664
      %873 = vmatpush2.bf16.msra.mxu0 %v663
      %874 = vmatprep.subr.bf16.mxu0 %v662
      %875 = vmatpush2.bf16.msra.mxu0 %v661
      %876 = vmatprep.subr.bf16.mxu0 %v660
      %877 = vmatpush2.bf16.msra.mxu0 %v659
      %878 = vmatprep.mubr.bf16.mxu0 %v314
      %879 = vmatmul.mubr.bf16.gmra.mxu0 %v313
      %v880 = vpop.f32.mrf.mxu0
      %v881 = vadd.f32 %v838, %v880
      %v882 = vpop.f32.mrf.mxu0
      %v883 = vadd.f32 %v840, %v882
      %v884 = vpop.f32.mrf.mxu0
      %v885 = vadd.f32 %v842, %v884
      %v886 = vpop.f32.mrf.mxu0
      %v887 = vadd.f32 %v844, %v886
      %888 = vdwg.mxu0
      %889 = vmatprep.subr.bf16.mxu0 %v690
      %890 = vmatpush1.bf16.msra.mxu0 %v689
      %891 = vmatprep.subr.bf16.mxu0 %v688
      %892 = vmatpush1.bf16.msra.mxu0 %v687
      %893 = vmatprep.subr.bf16.mxu0 %v686
      %894 = vmatpush1.bf16.msra.mxu0 %v685
      %895 = vmatprep.subr.bf16.mxu0 %v684
      %896 = vmatpush1.bf16.msra.mxu0 %v683
      %897 = vmatprep.subr.bf16.mxu0 %v682
      %898 = vmatpush1.bf16.msra.mxu0 %v681
      %899 = vmatprep.subr.bf16.mxu0 %v680
      %900 = vmatpush1.bf16.msra.mxu0 %v679
      %901 = vmatprep.subr.bf16.mxu0 %v678
      %902 = vmatpush1.bf16.msra.mxu0 %v677
      %903 = vmatprep.subr.bf16.mxu0 %v676
      %904 = vmatpush1.bf16.msra.mxu0 %v675
      %905 = vmatprep.subr.bf16.mxu0 %v706
      %906 = vmatpush2.bf16.msra.mxu0 %v705
      %907 = vmatprep.subr.bf16.mxu0 %v704
      %908 = vmatpush2.bf16.msra.mxu0 %v703
      %909 = vmatprep.subr.bf16.mxu0 %v702
      %910 = vmatpush2.bf16.msra.mxu0 %v701
      %911 = vmatprep.subr.bf16.mxu0 %v700
      %912 = vmatpush2.bf16.msra.mxu0 %v699
      %913 = vmatprep.subr.bf16.mxu0 %v698
      %914 = vmatpush2.bf16.msra.mxu0 %v697
      %915 = vmatprep.subr.bf16.mxu0 %v696
      %916 = vmatpush2.bf16.msra.mxu0 %v695
      %917 = vmatprep.subr.bf16.mxu0 %v694
      %918 = vmatpush2.bf16.msra.mxu0 %v693
      %919 = vmatprep.subr.bf16.mxu0 %v692
      %920 = vmatpush2.bf16.msra.mxu0 %v691
      %921 = vmatprep.mubr.bf16.mxu0 %v316
      %922 = vmatmul.mubr.bf16.gmra.mxu0 %v315
      %v923 = vpop.f32.mrf.mxu0
      %v924 = vadd.f32 %v881, %v923
      %v925 = vpop.f32.mrf.mxu0
      %v926 = vadd.f32 %v883, %v925
      %v927 = vpop.f32.mrf.mxu0
      %v928 = vadd.f32 %v885, %v927
      %v929 = vpop.f32.mrf.mxu0
      %v930 = vadd.f32 %v887, %v929
      %931 = vdwg.mxu0
      %932 = vst [vmem:[%s177] sm:$0xff] %v924
      %933 = vst [vmem:[%s177 + $0x8] sm:$0xff] %v926
      %934 = vst [vmem:[%s177 + $0x10] sm:$0xff] %v928
      %935 = vst [vmem:[%s177 + $0x18] sm:$0xff] %v930
      %s936 = smul.u32 2, %s14
      %p937 = scmp.lt.s32.totalorder %s936, 3
      %s938 = scalar_select %p937, %s936, 3
      %s939 = smul.addr %s938, 2
      %s940 = smul.addr %s939, 8
      %s941 = scalar_lea.vmem %s3, %s940
      // Predicated region
      $region33: #{patch_embed_forward.1} parent=31 // pred_check
        %p942 = pneg %p100
      $region34: #{patch_embed_forward.1} parent=31 // pred_check_branch
        %944 = sbr.rel (%p942) target = $region36
      $region35: #{patch_embed_forward.1} parent=31 // pred_region
        %s945 = smul.u32 2, %s14
      $region36: #{patch_embed_forward.1} parent=31 // pred_fallthru
        _
    $region32: #{patch_embed_forward.1} parent=5 // pred_fallthru
      _
    %p946 = scmp.le.s32.totalorder 2, %s9
    // Predicated region
    $region37: #{patch_embed_forward.1} parent=5 // pred_check
      %p947 = pneg %p946
    $region38: #{patch_embed_forward.1} parent=5 // pred_check_branch
      %949 = sbr.rel (%p947) target = $region40
    $region39: #{patch_embed_forward.1} parent=5 // pred_region
      %s950 = ssub.s32 %s9, 2
      // Predicated region
      $region41: #{patch_embed_forward.1} parent=39 // pred_check
        %p951 = pneg %p106
      $region42: #{patch_embed_forward.1} parent=39 // pred_check_branch
        %953 = sbr.rel (%p951) target = $region44
      $region43: #{patch_embed_forward.1} parent=39 // pred_region
        %s954 = smul.u32 2, %s15
        %p955 = scmp.lt.s32.totalorder %s954, 3
        %s956 = scalar_select %p955, %s954, 3
        %s957 = smul.addr %s956, 2
        %s958 = smul.addr %s957, 8
        %s959 = scalar_lea.vmem %s3, %s958
      $region44: #{patch_embed_forward.1} parent=39 // pred_fallthru
        _
    $region40: #{patch_embed_forward.1} parent=5 // pred_fallthru
      _
  $region6: #{patch_embed_forward.1} parent=0 // loop_footer
    %s13 = sadd.s32 1, %s9
  $region7: #{patch_embed_forward.1} parent=0 // loop_footer_branch
    %8 = sbr.rel target = $region3
  $region8: #{patch_embed_forward.1} parent=0 // loop_exit
    _

</llo_original>
